<compile_context>
chip_gen: v7x
topology: tpu7x:2x2x1
jax: 0.10.0
libtpu: 0.0.40
codegen_flags: <defaults>
</compile_context>

<pallas_src>
import jax
import jax.numpy as jnp
import numpy as np
from jax.experimental import pallas as pl
from jax.experimental.pallas import tpu as pltpu

P_DROP = 0.5                                   # nn.Dropout() default
KEEP_SCALE = 1.0 / (1.0 - P_DROP)              # inverted-dropout scale
# keep iff bits >= threshold  ->  P(keep) = 1 - p   (exact 2**31 at p = 0.5)
KEEP_THRESHOLD = np.uint32(int(P_DROP * (1 << 32)) & 0xFFFFFFFF)

LANES = 512            # lane-dense last dim (multiple of 128)
MAX_BLOCK_BYTES = 8 << 20   # ~8 MiB streamed block; 4 bufs -> <=32 MiB resident

_ON_TPU = jax.default_backend() == "tpu"


def _dropout_prng_kernel(seed_ref, x_ref, o_ref):
    # Fold the grid index into the seed so every tile (and every TensorCore
    # when the axis is sharded "parallel" on v7x) draws an independent stream.
    pltpu.prng_seed(seed_ref[0], pl.program_id(0))
    bits = pltpu.prng_random_bits(x_ref.shape)
    if bits.dtype != jnp.uint32:
        bits = pltpu.bitcast(bits, jnp.uint32)
    keep = bits >= KEEP_THRESHOLD
    o_ref[...] = jnp.where(keep, x_ref[...] * KEEP_SCALE, 0).astype(o_ref.dtype)


def _dropout_apply_kernel(x_ref, bits_ref, o_ref):
    keep = bits_ref[...] >= KEEP_THRESHOLD
    o_ref[...] = jnp.where(keep, x_ref[...] * KEEP_SCALE, 0).astype(o_ref.dtype)


def _round_up(x, m):
    return -(-x // m) * m


def _cdiv(a, b):
    return -(-a // b)


def _sublane_multiple(dtype):
    # f32 -> 8, bf16/f16 -> 16, int8/fp8 -> 32 (packed sublanes).
    return max(8, 32 // jnp.dtype(dtype).itemsize)


@jax.jit
def dropout_pallas(x, seed):
    """Training-mode dropout (p=0.5) applied to `x`; `seed` is an int32 scalar."""
    orig_shape = x.shape
    dtype = x.dtype
    itemsize = jnp.dtype(dtype).itemsize
    n = x.size

    sub = _sublane_multiple(dtype)
    rows = _cdiv(n, LANES)
    n_rows = rows * LANES

    flat = x.reshape(-1)
    padded = n_rows != n
    if padded:
        # Only the <512-element ragged tail is ever padded (single small copy).
        # TODO(synk): handle the ragged tail fully in-kernel (masked store of
        # the final row via pltpu.store) to remove even this copy.
        flat = jnp.pad(flat, (0, n_rows - n))
    x2d = flat.reshape(rows, LANES)

    # Block sizing: <= ~8 MiB to amortize per-step overhead, >= 4 grid steps
    # for mid-size inputs (v7x TensorCore split), rounded to the sublane
    # multiple.  Rows are NOT rounded up to block_rows -- the ceiling grid plus
    # Pallas' partial-block masking handles the remainder with zero extra DMA.
    max_block_rows = max(sub, (MAX_BLOCK_BYTES // (LANES * itemsize)) // sub * sub)
    block_rows = min(max_block_rows, _round_up(_cdiv(rows, 4), sub))
    if block_rows >= rows:
        block_rows = rows        # block == full dim (always legal)

    grid = (_cdiv(rows, block_rows),)
    block = (block_rows, LANES)
    data_spec = pl.BlockSpec(block, lambda i: (i, 0))
    out_shape = jax.ShapeDtypeStruct((rows, LANES), dtype)

    block_bytes = block_rows * LANES * itemsize
    # 2 streamed arrays x 2 buffers x block + headroom; capped under v7x's
    # 64 MiB/TC, and explicitly above v5e's 16 MiB scoped default.
    vmem_limit = int(min(48 << 20, max(16 << 20, 4 * block_bytes + (8 << 20))))
    cost = pl.CostEstimate(
        flops=2 * rows * LANES,
        transcendentals=0,
        bytes_accessed=2 * rows * LANES * itemsize,
    )

    if _ON_TPU:
        seed_arr = jnp.asarray([seed], dtype=jnp.int32)
        out2d = pl.pallas_call(
            _dropout_prng_kernel,
            out_shape=out_shape,
            grid=grid,
            in_specs=[
                pl.BlockSpec(memory_space=pltpu.MemorySpace.SMEM),  # seed scalar
                data_spec,
            ],
            out_specs=data_spec,
            compiler_params=pltpu.CompilerParams(
                dimension_semantics=("parallel",),   # v7x: shard grid over 2 TCs
                vmem_limit_bytes=vmem_limit),
            cost_estimate=cost,
        )(seed_arr, x2d)
    else:
        # Non-TPU fallback only: pltpu.prng_* has no CPU/interpret lowering.
        bits = jax.random.bits(jax.random.PRNGKey(seed), (rows, LANES),
                               dtype=jnp.uint32)
        out2d = pl.pallas_call(
            _dropout_apply_kernel,
            out_shape=out_shape,
            grid=grid,
            in_specs=[data_spec, data_spec],
            out_specs=data_spec,
        )(x2d, bits)

    out = out2d.reshape(-1)
    if padded:
        out = out[:n]
    return out.reshape(orig_shape)


if __name__ == "__main__":
    key = jax.random.PRNGKey(0)
    x = jax.random.normal(key, (2, 4, 16, 16), dtype=jnp.float32)

    y = dropout_pallas(x, 0)
    y = jax.block_until_ready(y)

    # Forward-pass semantics of nn.Dropout() in training mode:
    # dropped elements are exactly 0, kept elements are scaled by 1/(1-p).
    assert y.shape == x.shape and y.dtype == x.dtype
    kept = y != 0.0
    ok = jnp.where(kept, jnp.isclose(y, x * KEEP_SCALE, rtol=1e-6, atol=1e-6), True)
    assert bool(jnp.all(ok))
    drop_frac = 1.0 - float(jnp.mean(kept.astype(jnp.float32)))
    assert 0.3 < drop_frac < 0.7, drop_frac

    print("KERNEL_OK")
</pallas_src>

<mosaic_0001>
module attributes {stable_mosaic.version = 11 : i64} {
  func.func @_dropout_apply_kernel(%arg0: i32, %arg1: memref<4x512xf32, #tpu.memory_space<vmem>>, %arg2: memref<4x512xi32, #tpu.memory_space<vmem>>, %arg3: memref<4x512xf32, #tpu.memory_space<vmem>>) attributes {dimension_semantics = [#tpu.dimension_semantics<arbitrary>], iteration_bounds = array<i64: 1>, scalar_prefetch = 0 : i64, scratch_operands = 0 : i64, tpu.core_type = #tpu.core_type<tc>, window_params = [{transform_indices = @transform_0, window_bounds = array<i64: 4, 512>}, {transform_indices = @transform_1, window_bounds = array<i64: 4, 512>}, {transform_indices = @transform_2, window_bounds = array<i64: 4, 512>}]} {
    %c0 = arith.constant 0 : index
    %c0_0 = arith.constant 0 : index
    %0 = vector.load %arg2[%c0, %c0_0] : memref<4x512xi32, #tpu.memory_space<vmem>>, vector<4x512xi32>
    %c-2147483648_i32 = arith.constant -2147483648 : i32
    %1 = vector.broadcast %c-2147483648_i32 : i32 to vector<4x512xi32>
    %2 = arith.cmpi uge, %0, %1 : vector<4x512xi32>
    %c0_1 = arith.constant 0 : index
    %c0_2 = arith.constant 0 : index
    %3 = vector.load %arg1[%c0_1, %c0_2] : memref<4x512xf32, #tpu.memory_space<vmem>>, vector<4x512xf32>
    %cst = arith.constant 2.000000e+00 : f32
    %4 = vector.broadcast %cst : f32 to vector<4x512xf32>
    %5 = arith.mulf %3, %4 : vector<4x512xf32>
    %c0_i32 = arith.constant 0 : i32
    %6 = arith.sitofp %c0_i32 : i32 to f32
    %7 = vector.broadcast %6 : f32 to vector<4x512xf32>
    %8 = arith.select %2, %5, %7 : vector<4x512xi1>, vector<4x512xf32>
    %c0_3 = arith.constant 0 : index
    %c0_4 = arith.constant 0 : index
    %9 = vector.load %arg3[%c0_3, %c0_4] : memref<4x512xf32, #tpu.memory_space<vmem>>, vector<4x512xf32>
    tpu.vector_store %arg3[%c0_3, %c0_4], %8 {strides = array<i32>} : memref<4x512xf32, #tpu.memory_space<vmem>>, vector<4x512xf32>,
    return
  }
  func.func @transform_0(%arg0: i32) -> (i32, i32) {
    %c0_i32 = arith.constant 0 : i32
    %c0_i32_0 = arith.constant 0 : i32
    return %arg0, %c0_i32 : i32, i32
  }
  func.func @transform_1(%arg0: i32) -> (i32, i32) {
    %c0_i32 = arith.constant 0 : i32
    %c0_i32_0 = arith.constant 0 : i32
    return %arg0, %c0_i32 : i32, i32
  }
  func.func @transform_2(%arg0: i32) -> (i32, i32) {
    %c0_i32 = arith.constant 0 : i32
    %c0_i32_0 = arith.constant 0 : i32
    return %arg0, %c0_i32 : i32, i32
  }
}

</mosaic_0001>

<llo_original>
// kernel: dropout_pallas.1
$region0: #{dropout_pallas.1}
  #allocation0 [shape = 'u32[]', space=smem, size = 0x4, offset = 0x4, fixed_abs, tag = 'smem constant byte address 0x4 - core index']
  #allocation1 [shape = 'u32[144,128]{1,0:T(1,128)}', space=vmem, size = 0x12000, scoped, tag = 'internal scratch']
  %s0 = inlined_call_operand.vmem [shape: f32[4,512], index: 0, kind: input, shape index: {}]
  %s1 = inlined_call_operand.vmem [shape: u32[4,512], index: 1, kind: input, shape index: {}]
  %s2 = inlined_call_operand.vmem [shape: f32[4,512], index: 2, kind: output, shape index: {}]
  %s3 = sld [smem:[#allocation0]]
  $region18: #{dropout_pallas.1} parent=0
    _
  %s5 = ssub.s32 1, %s3
  %s6 = scalar_select 0, %s5, %s3
  // Predicated region
  $region2: #{dropout_pallas.1} parent=0 // pred_check
    _
  $region3: #{dropout_pallas.1} parent=0 // pred_check_branch
    %8 = sbr.rel (0) target = $region5
  $region4: #{dropout_pallas.1} parent=0 // pred_region
    _
  $region5: #{dropout_pallas.1} parent=0 // pred_fallthru
    _
  // Predicated region
  $region6: #{dropout_pallas.1} parent=0 // pred_check
    _
  $region7: #{dropout_pallas.1} parent=0 // pred_check_branch
    %10 = sbr.rel (0) target = $region9
  $region8: #{dropout_pallas.1} parent=0 // pred_region
    _
  $region9: #{dropout_pallas.1} parent=0 // pred_fallthru
    _
  %v11 = vld [vmem:[%s1] sm:$0xff]
  %v12 = vld [vmem:[%s1 + $0x8] sm:$0xff]
  %vm13 = vcmp.ge.u32.totalorder %v11, 2147483648
  %vm14 = vcmp.ge.u32.totalorder %v12, 2147483648
  %v15 = vld [vmem:[%s0] sm:$0xff]
  %v16 = vld [vmem:[%s0 + $0x8] sm:$0xff]
  %v17 = vmul.f32 %v15, 2.0
  %v18 = vmul.f32 %v16, 2.0
  %v19 = vsel %vm13, %v17, 0.0
  %v20 = vsel %vm14, %v18, 0.0
  %21 = vst [vmem:[%s2] sm:$0xff] %v19
  %22 = vst [vmem:[%s2 + $0x8] sm:$0xff] %v20
  // Predicated region
  $region10: #{dropout_pallas.1} parent=0 // pred_check
    _
  $region11: #{dropout_pallas.1} parent=0 // pred_check_branch
    %24 = sbr.rel (0) target = $region13
  $region12: #{dropout_pallas.1} parent=0 // pred_region
    _
  $region13: #{dropout_pallas.1} parent=0 // pred_fallthru
    _
  // Predicated region
  $region14: #{dropout_pallas.1} parent=0 // pred_check
    _
  $region15: #{dropout_pallas.1} parent=0 // pred_check_branch
    %26 = sbr.rel (0) target = $region17
  $region16: #{dropout_pallas.1} parent=0 // pred_region
    _
  $region17: #{dropout_pallas.1} parent=0 // pred_fallthru
    _

</llo_original>
